<compile_context>
chip_gen: v5e
topology: v5e:2x2
jax: 0.10.0
libtpu: 0.0.40
codegen_flags: <defaults>
</compile_context>

<pallas_src>
import functools
import math

import jax
import jax.numpy as jnp
from jax import lax
from jax.experimental import pallas as pl
from jax.experimental.pallas import tpu as pltpu


# ----------------------------- tiling helpers ------------------------------

_MB = 1024 * 1024


@functools.lru_cache(maxsize=None)
def _vmem_limit_bytes():
    # v7x: 64 MiB VMEM per TensorCore -> leave headroom for Mosaic scratch.
    # v5e/v6e: 128 MiB -> allow bigger tiles.
    try:
        cap = int(getattr(pltpu.get_tpu_info(), "vmem_capacity_bytes",
                          128 * _MB))
    except Exception:
        cap = 128 * _MB
    return 40 * _MB if cap <= 64 * _MB else 64 * _MB


def _cp(n_grid_axes=1):
    return pltpu.CompilerParams(
        dimension_semantics=("parallel",) * n_grid_axes,
        vmem_limit_bytes=_vmem_limit_bytes(),
    )


def _cdiv(a, b):
    return (a + b - 1) // b


def _choose_tm(m, tm_max=512):
    """Row-tile size for an (m, ...) token-major activation.

    Large inputs get >= 2 row tiles so the "parallel" grid axis can be
    sharded across both v7x TensorCores."""
    if m <= 256:
        return m, 1
    half = _cdiv(_cdiv(m, 2), 8) * 8
    tm = min(tm_max, half)
    return tm, _cdiv(m, tm)


def _choose_tq(lq, tq_max=256):
    if lq <= tq_max:
        return lq, 1
    return tq_max, _cdiv(lq, tq_max)


def _row(i):
    return (i, 0)


def _full(i):
    return (0, 0)


# ----------------------------- Pallas kernels ------------------------------

def _masked_linear_kernel(x_ref, m_ref, w_ref, b_ref, o_ref):
    y = jnp.dot(x_ref[...].astype(jnp.bfloat16), w_ref[...],
                preferred_element_type=jnp.float32) + b_ref[...]
    o_ref[...] = (y * m_ref[...]).astype(o_ref.dtype)


def masked_linear_pallas(x, keep_mask, w, b, tm_max=512):
    """Value projection with padding-mask zeroing fused in; bf16 output.

    x: (N, S, Din); keep_mask: (N, S) float in {0., 1.}."""
    N, S, din = x.shape
    dout = w.shape[1]
    x2 = x.reshape(-1, din)
    m2 = keep_mask.reshape(-1, 1).astype(jnp.float32)
    m = x2.shape[0]
    tm, ng = _choose_tm(m, tm_max)
    out = pl.pallas_call(
        _masked_linear_kernel,
        out_shape=jax.ShapeDtypeStruct((m, dout), jnp.bfloat16),
        grid=(ng,),
        in_specs=[pl.BlockSpec((tm, din), _row),
                  pl.BlockSpec((tm, 1), _row),
                  pl.BlockSpec((din, dout), _full),
                  pl.BlockSpec((1, dout), _full)],
        out_specs=pl.BlockSpec((tm, dout), _row),
        compiler_params=_cp(),
    )(x2, m2, w.astype(jnp.bfloat16), b.reshape(1, dout))
    return out.reshape(N, S, dout)


def _soaw_kernel(x_ref, p_ref, w_ref, b_ref, o_ref, *, n_so, n_heads, lp):
    # (query + pos) @ W + b, with per-head softmax over the attention-weight
    # lane segments fused in (L*P lanes per head).
    q = (x_ref[...] + p_ref[...]).astype(jnp.bfloat16)
    y = jnp.dot(q, w_ref[...], preferred_element_type=jnp.float32) + b_ref[...]
    pieces = [y[:, :n_so]]
    for m in range(n_heads):
        a = y[:, n_so + m * lp:n_so + (m + 1) * lp]
        a = a - jnp.max(a, axis=-1, keepdims=True)
        e = jnp.exp(a)
        pieces.append(e * pl.reciprocal(jnp.sum(e, axis=-1, keepdims=True),
                                        approx=True))
    o_ref[...] = jnp.concatenate(pieces, axis=-1).astype(o_ref.dtype)


def soaw_pallas(x, pos, w, b, n_so, n_heads, lp, tm_max=512):
    lead = x.shape[:-1]
    din = x.shape[-1]
    dout = w.shape[1]
    x2 = x.reshape(-1, din)
    p2 = pos.reshape(-1, din)
    m = x2.shape[0]
    tm, ng = _choose_tm(m, tm_max)
    out = pl.pallas_call(
        functools.partial(_soaw_kernel, n_so=n_so, n_heads=n_heads, lp=lp),
        out_shape=jax.ShapeDtypeStruct((m, dout), jnp.float32),
        grid=(ng,),
        in_specs=[pl.BlockSpec((tm, din), _row),
                  pl.BlockSpec((tm, din), _row),
                  pl.BlockSpec((din, dout), _full),
                  pl.BlockSpec((1, dout), _full)],
        out_specs=pl.BlockSpec((tm, dout), _row),
        compiler_params=_cp(),
    )(x2, p2, w.astype(jnp.bfloat16), b.reshape(1, dout))
    return out.reshape(*lead, dout)


def _proj_add_ln_kernel(a_ref, x_ref, w_ref, b_ref, g_ref, be_ref, o_ref, *,
                        eps):
    y = x_ref[...] + jnp.dot(a_ref[...].astype(jnp.bfloat16), w_ref[...],
                             preferred_element_type=jnp.float32) + b_ref[...]
    mean = jnp.mean(y, axis=-1, keepdims=True)
    c = y - mean
    var = jnp.mean(c * c, axis=-1, keepdims=True)
    o_ref[...] = (c * lax.rsqrt(var + eps) * g_ref[...]
                  + be_ref[...]).astype(o_ref.dtype)


def proj_add_ln_pallas(attn, resid, w, b, gamma, beta, eps=1e-5, tm_max=512):
    """LayerNorm(resid + attn @ w + b): output projection fused with
    residual + LayerNorm."""
    lead = resid.shape[:-1]
    d = resid.shape[-1]
    a2 = attn.reshape(-1, d)
    x2 = resid.reshape(-1, d)
    m = x2.shape[0]
    tm, ng = _choose_tm(m, tm_max)
    out = pl.pallas_call(
        functools.partial(_proj_add_ln_kernel, eps=eps),
        out_shape=jax.ShapeDtypeStruct((m, d), jnp.float32),
        grid=(ng,),
        in_specs=[pl.BlockSpec((tm, d), _row),
                  pl.BlockSpec((tm, d), _row),
                  pl.BlockSpec((d, d), _full),
                  pl.BlockSpec((1, d), _full),
                  pl.BlockSpec((1, d), _full),
                  pl.BlockSpec((1, d), _full)],
        out_specs=pl.BlockSpec((tm, d), _row),
        compiler_params=_cp(),
    )(a2, x2, w.astype(jnp.bfloat16), b.reshape(1, d),
      gamma.reshape(1, d), beta.reshape(1, d))
    return out.reshape(*lead, d)


def _ffn_ln_kernel(x_ref, w1_ref, b1_ref, w2_ref, b2_ref, g_ref, b_ref, o_ref,
                   *, eps):
    x = x_ref[...]
    h = jnp.dot(x.astype(jnp.bfloat16), w1_ref[...],
                preferred_element_type=jnp.float32) + b1_ref[...]
    h = jnp.maximum(h, 0.0)
    y = x + jnp.dot(h.astype(jnp.bfloat16), w2_ref[...],
                    preferred_element_type=jnp.float32) + b2_ref[...]
    mean = jnp.mean(y, axis=-1, keepdims=True)
    c = y - mean
    var = jnp.mean(c * c, axis=-1, keepdims=True)
    o_ref[...] = (c * lax.rsqrt(var + eps) * g_ref[...]
                  + b_ref[...]).astype(o_ref.dtype)


def ffn_layernorm_pallas(x, w1, b1, w2, b2, gamma, beta, eps=1e-5, tm_max=256):
    """LayerNorm(x + relu(x@w1+b1)@w2+b2): FFN intermediate never leaves VMEM."""
    lead = x.shape[:-1]
    d = x.shape[-1]
    d_ffn = w1.shape[1]
    x2 = x.reshape(-1, d)
    m = x2.shape[0]
    tm, ng = _choose_tm(m, tm_max)
    out = pl.pallas_call(
        functools.partial(_ffn_ln_kernel, eps=eps),
        out_shape=jax.ShapeDtypeStruct((m, d), jnp.float32),
        grid=(ng,),
        in_specs=[pl.BlockSpec((tm, d), _row),
                  pl.BlockSpec((d, d_ffn), _full),
                  pl.BlockSpec((1, d_ffn), _full),
                  pl.BlockSpec((d_ffn, d), _full),
                  pl.BlockSpec((1, d), _full),
                  pl.BlockSpec((1, d), _full),
                  pl.BlockSpec((1, d), _full)],
        out_specs=pl.BlockSpec((tm, d), _row),
        compiler_params=_cp(),
    )(x2, w1.astype(jnp.bfloat16), b1.reshape(1, d_ffn),
      w2.astype(jnp.bfloat16), b2.reshape(1, d),
      gamma.reshape(1, d), beta.reshape(1, d))
    return out.reshape(*lead, d)


def _dec_self_attn_kernel(x_ref, p_ref, wqk_ref, bqk_ref, wv_ref, bv_ref,
                          wo_ref, bo_ref, g_ref, be_ref, o_ref, *,
                          n_heads, eps):
    # Fully fused decoder self-attention: QKV proj + per-head attention +
    # output proj + residual + LayerNorm; lane-dense output.
    x = x_ref[0]                                    # (L, d) f32
    xp = (x + p_ref[0]).astype(jnp.bfloat16)
    qk = jnp.dot(xp, wqk_ref[...],
                 preferred_element_type=jnp.float32) + bqk_ref[...]
    v = jnp.dot(x.astype(jnp.bfloat16), wv_ref[...],
                preferred_element_type=jnp.float32) + bv_ref[...]
    lq, d = x.shape
    dh = d // n_heads
    scale = 1.0 / math.sqrt(dh)
    heads = []
    for h in range(n_heads):
        qh = (qk[:, h * dh:(h + 1) * dh] * scale).astype(jnp.bfloat16)
        kh = qk[:, d + h * dh:d + (h + 1) * dh].astype(jnp.bfloat16)
        vh = v[:, h * dh:(h + 1) * dh].astype(jnp.bfloat16)
        s = lax.dot_general(qh, kh, (((1,), (1,)), ((), ())),
                            preferred_element_type=jnp.float32)    # (L, L)
        s = s - jnp.max(s, axis=-1, keepdims=True)
        pr = jnp.exp(s)
        pr = pr * pl.reciprocal(jnp.sum(pr, axis=-1, keepdims=True),
                                approx=True)
        heads.append(jnp.dot(pr.astype(jnp.bfloat16), vh,
                             preferred_element_type=jnp.float32))
    att = jnp.concatenate(heads, axis=-1)           # (L, d) lane-dense
    y = x + jnp.dot(att.astype(jnp.bfloat16), wo_ref[...],
                    preferred_element_type=jnp.float32) + bo_ref[...]
    mean = jnp.mean(y, axis=-1, keepdims=True)
    c = y - mean
    var = jnp.mean(c * c, axis=-1, keepdims=True)
    o_ref[0] = (c * lax.rsqrt(var + eps) * g_ref[...]
                + be_ref[...]).astype(o_ref.dtype)


def dec_self_attn_pallas(p, tgt, query_pos, norm, n_heads, eps=1e-5):
    B, L, d = tgt.shape
    bf = jnp.bfloat16
    blk = pl.BlockSpec((1, L, d), lambda b: (b, 0, 0))

    def full2(shape):
        return pl.BlockSpec(shape, lambda b: (0, 0))

    out = pl.pallas_call(
        functools.partial(_dec_self_attn_kernel, n_heads=n_heads, eps=eps),
        out_shape=jax.ShapeDtypeStruct((B, L, d), jnp.float32),
        grid=(B,),
        in_specs=[blk, blk,
                  full2((d, 2 * d)), full2((1, 2 * d)),
                  full2((d, d)), full2((1, d)),
                  full2((d, d)), full2((1, d)),
                  full2((1, d)), full2((1, d))],
        out_specs=blk,
        compiler_params=_cp(1),
    )(tgt, query_pos,
      p['wqk'].astype(bf), p['bqk'].reshape(1, -1),
      p['wv'].astype(bf), p['bv'].reshape(1, -1),
      p['wo'].astype(bf), p['bo'].reshape(1, -1),
      norm['g'].reshape(1, -1), norm['b'].reshape(1, -1))
    return out


def _msdeform_kernel(*refs, shapes, n_heads, n_points):
    # refs = [locx_0, locy_0, aw_0, ..., locx_{L-1}, locy_{L-1}, aw_{L-1},
    #         val_0, ..., val_{L-1}, o_ref]
    # Bilinear gather as a one-hot matmul on the MXU: the bilinear weights,
    # zero-padding validity and softmaxed attention weights are folded into
    # one (tq, HW) gather matrix per head/level; value slabs stay VMEM
    # resident across query tiles and levels are accumulated in-kernel.
    # TODO(synk): no native dynamic-gather path used here; the one-hot matmul
    # trades FLOPs for a fully VMEM-resident, HBM-intermediate-free gather.
    n_levels = len(shapes)
    loc_refs = refs[:3 * n_levels]
    val_refs = refs[3 * n_levels:4 * n_levels]
    o_ref = refs[4 * n_levels]
    tq = o_ref.shape[1]
    d = o_ref.shape[2]
    D = d // n_heads
    acc = [jnp.zeros((tq, D), jnp.float32) for _ in range(n_heads)]
    for l in range(n_levels):
        H, W = shapes[l]
        HW = H * W
        lx = loc_refs[3 * l][0]           # (tq, M, P)
        ly = loc_refs[3 * l + 1][0]
        aw = loc_refs[3 * l + 2][0]
        v = val_refs[l][0]                # (HW, d) bf16, VMEM resident
        x = lx * W - 0.5                  # grid_sample, align_corners=False
        y = ly * H - 0.5
        x0 = jnp.floor(x)
        y0 = jnp.floor(y)
        x1 = x0 + 1.0
        y1 = y0 + 1.0
        wx1 = x - x0
        wx0 = 1.0 - wx1
        wy1 = y - y0
        wy0 = 1.0 - wy1
        iota = lax.broadcasted_iota(jnp.int32, (tq, n_points, HW), 2)
        corners = ((x0, y0, wx0 * wy0), (x1, y0, wx1 * wy0),
                   (x0, y1, wx0 * wy1), (x1, y1, wx1 * wy1))
        for m in range(n_heads):
            A = jnp.zeros((tq, HW), jnp.float32)
            for cx, cy, cw in corners:
                cxm = cx[:, m, :]
                cym = cy[:, m, :]
                valid = ((cxm >= 0.0) & (cxm <= W - 1.0)
                         & (cym >= 0.0) & (cym <= H - 1.0))
                idx = (jnp.clip(cym, 0.0, H - 1.0) * W
                       + jnp.clip(cxm, 0.0, W - 1.0)).astype(jnp.int32)
                wgt = cw[:, m, :] * aw[:, m, :] * valid.astype(jnp.float32)
                onehot = (idx[:, :, None] == iota).astype(jnp.float32)
                A = A + jnp.sum(onehot * wgt[:, :, None], axis=1)
            acc[m] = acc[m] + jnp.dot(
                A.astype(jnp.bfloat16), v[:, m * D:(m + 1) * D],
                preferred_element_type=jnp.float32)
    o_ref[0] = jnp.concatenate(acc, axis=-1).astype(o_ref.dtype)


def msdeform_core_pallas(value, loc_x, loc_y, attw, spatial_shapes_list):
    """value: (N, S, d) bf16; loc_x/loc_y/attw: (N, Lq, M, L, P).
    Returns the pre-output-projection attention result (N, Lq, d)."""
    N, S, d = value.shape
    _, Lq, M, L, P = attw.shape
    tq, nq = _choose_tq(Lq)
    offs = [0]
    for (h, w) in spatial_shapes_list:
        offs.append(offs[-1] + h * w)
    loc_spec = pl.BlockSpec((1, tq, M, P), lambda n, q: (n, q, 0, 0))
    args, in_specs = [], []
    for l in range(L):
        args += [loc_x[:, :, :, l, :], loc_y[:, :, :, l, :],
                 attw[:, :, :, l, :]]
        in_specs += [loc_spec, loc_spec, loc_spec]
    for l in range(L):
        hw = offs[l + 1] - offs[l]
        args.append(value[:, offs[l]:offs[l + 1], :])
        in_specs.append(pl.BlockSpec((1, hw, d), lambda n, q: (n, 0, 0)))
    return pl.pallas_call(
        functools.partial(_msdeform_kernel,
                          shapes=tuple(spatial_shapes_list),
                          n_heads=M, n_points=P),
        out_shape=jax.ShapeDtypeStruct((N, Lq, d), jnp.float32),
        grid=(N, nq),
        in_specs=in_specs,
        out_specs=pl.BlockSpec((1, tq, d), lambda n, q: (n, q, 0)),
        compiler_params=_cp(2),
    )(*args)


# ------------------------------ attention blocks -----------------------------

def msdeform_attn_forward(p, query_src, query_pos, reference_points,
                          input_flatten, keep_mask, spatial_shapes_list,
                          spatial_shapes_arr, cfg):
    """Returns the pre-output-projection MSDeformAttn result (N, Lq, d)."""
    N, Lq, d = query_src.shape
    M, L, P = cfg['nhead'], cfg['n_levels'], cfg['n_points']
    # value projection with padding-mask zeroing fused in (bf16 output)
    value = masked_linear_pallas(input_flatten, keep_mask, p['vp_w'], p['vp_b'])
    # fused sampling-offset + softmaxed attention-weight projection
    n_so = M * L * P * 2
    soaw = soaw_pallas(query_src, query_pos, p['soaw_w'], p['soaw_b'],
                       n_so, M, L * P)
    so = soaw[..., :n_so].reshape(N, Lq, M, L, P, 2)
    aw = soaw[..., n_so:].reshape(N, Lq, M, L, P)
    # sampling-location arithmetic on tiny tensors -> plain JAX
    if reference_points.shape[-1] == 2:
        offset_normalizer = jnp.stack(
            [spatial_shapes_arr[:, 1], spatial_shapes_arr[:, 0]], -1
        ).astype(jnp.float32)
        loc = (reference_points[:, :, None, :, None, :]
               + so / offset_normalizer[None, None, None, :, None, :])
    else:  # shape[-1] == 4
        loc = (reference_points[:, :, None, :, None, :2]
               + so / P * reference_points[:, :, None, :, None, 2:] * 0.5)
    return msdeform_core_pallas(value, loc[..., 0], loc[..., 1], aw,
                                spatial_shapes_list)


def encoder_layer_forward(p, src, pos, reference_points, spatial_shapes_list,
                          spatial_shapes_arr, keep_mask, cfg):
    attn = msdeform_attn_forward(p['self_attn'], src, pos, reference_points,
                                 src, keep_mask, spatial_shapes_list,
                                 spatial_shapes_arr, cfg)
    src = proj_add_ln_pallas(attn, src, p['self_attn']['op_w'],
                             p['self_attn']['op_b'],
                             p['norm1']['g'], p['norm1']['b'])
    src = ffn_layernorm_pallas(src, p['l1_w'], p['l1_b'], p['l2_w'], p['l2_b'],
                               p['norm2']['g'], p['norm2']['b'])
    return src


def decoder_layer_forward(p, tgt, query_pos, reference_points, src,
                          spatial_shapes_list, spatial_shapes_arr,
                          keep_mask, cfg):
    # fused self-attention (incl. residual + norm2)
    tgt = dec_self_attn_pallas(p['self_attn'], tgt, query_pos, p['norm2'],
                               cfg['nhead'])
    # cross attention (MSDeformAttn) + fused output proj + residual + norm1
    attn = msdeform_attn_forward(p['cross_attn'], tgt, query_pos,
                                 reference_points, src, keep_mask,
                                 spatial_shapes_list, spatial_shapes_arr, cfg)
    tgt = proj_add_ln_pallas(attn, tgt, p['cross_attn']['op_w'],
                             p['cross_attn']['op_b'],
                             p['norm1']['g'], p['norm1']['b'])
    tgt = ffn_layernorm_pallas(tgt, p['l1_w'], p['l1_b'], p['l2_w'], p['l2_b'],
                               p['norm3']['g'], p['norm3']['b'])
    return tgt


# ------------------------------ JAX glue ops --------------------------------

def get_valid_ratio(mask):
    _, H, W = mask.shape
    valid_H = jnp.sum(~mask[:, :, 0], axis=1).astype(jnp.float32)
    valid_W = jnp.sum(~mask[:, 0, :], axis=1).astype(jnp.float32)
    return jnp.stack([valid_W / W, valid_H / H], -1)


def get_reference_points(spatial_shapes_list, valid_ratios):
    ref_list = []
    for lvl, (H, W) in enumerate(spatial_shapes_list):
        ref_y, ref_x = jnp.meshgrid(
            jnp.linspace(0.5, H - 0.5, H, dtype=jnp.float32),
            jnp.linspace(0.5, W - 0.5, W, dtype=jnp.float32), indexing='ij')
        ref_y = ref_y.reshape(-1)[None] / (valid_ratios[:, None, lvl, 1] * H)
        ref_x = ref_x.reshape(-1)[None] / (valid_ratios[:, None, lvl, 0] * W)
        ref_list.append(jnp.stack((ref_x, ref_y), -1))
    reference_points = jnp.concatenate(ref_list, 1)
    return reference_points[:, :, None] * valid_ratios[:, None]


def deformable_transformer_forward(params, srcs, masks, pos_embeds,
                                   query_embed, cfg):
    src_flatten, mask_flatten, lvl_pos_flatten = [], [], []
    spatial_shapes_list = []
    for lvl, (src, mask, pos) in enumerate(zip(srcs, masks, pos_embeds)):
        bs, c, h, w = src.shape
        spatial_shapes_list.append((h, w))
        src_flatten.append(jnp.transpose(src.reshape(bs, c, h * w), (0, 2, 1)))
        mask_flatten.append(mask.reshape(bs, h * w))
        pos = jnp.transpose(pos.reshape(bs, c, h * w), (0, 2, 1))
        lvl_pos_flatten.append(pos + params['level_embed'][lvl].reshape(1, 1, -1))
    src_flatten = jnp.concatenate(src_flatten, 1)
    mask_flatten = jnp.concatenate(mask_flatten, 1)
    lvl_pos = jnp.concatenate(lvl_pos_flatten, 1)
    keep_mask = 1.0 - mask_flatten.astype(jnp.float32)   # 1 = valid token
    spatial_shapes_arr = jnp.array(spatial_shapes_list, dtype=jnp.int32)
    valid_ratios = jnp.stack([get_valid_ratio(m) for m in masks], 1)

    # ----- encoder -----
    reference_points_enc = get_reference_points(spatial_shapes_list, valid_ratios)
    memory = src_flatten
    for lp in params['encoder_layers']:
        memory = encoder_layer_forward(lp, memory, lvl_pos, reference_points_enc,
                                       spatial_shapes_list, spatial_shapes_arr,
                                       keep_mask, cfg)

    bs = memory.shape[0]
    # ----- decoder prep (two_stage=False path) -----
    query_pos, tgt = jnp.split(query_embed, 2, axis=1)
    query_pos = jnp.broadcast_to(query_pos[None], (bs,) + query_pos.shape)
    tgt = jnp.broadcast_to(tgt[None], (bs,) + tgt.shape)
    # Tiny (d_model -> 2) projection: pure launch overhead in Pallas -> plain JAX.
    reference_points = jax.nn.sigmoid(
        jnp.matmul(query_pos, params['ref_w']) + params['ref_b'])
    init_reference_out = reference_points

    # ----- decoder (bbox_embed is None -> reference points fixed) -----
    output = tgt
    for lp in params['decoder_layers']:
        reference_points_input = reference_points[:, :, None] * valid_ratios[:, None]
        output = decoder_layer_forward(lp, output, query_pos,
                                       reference_points_input, memory,
                                       spatial_shapes_list, spatial_shapes_arr,
                                       keep_mask, cfg)
    return output, init_reference_out, reference_points, None, None


# --------------------------- parameter creation -----------------------------

def xavier_uniform(key, shape):
    fan_in, fan_out = shape
    limit = math.sqrt(6.0 / (fan_in + fan_out))
    return jax.random.uniform(key, shape, jnp.float32, -limit, limit)


def _ln(d):
    return dict(g=jnp.ones((d,), jnp.float32), b=jnp.zeros((d,), jnp.float32))


def init_msdeform_attn(key, d_model, n_levels, n_heads, n_points):
    k1, k2 = jax.random.split(key)
    thetas = jnp.arange(n_heads, dtype=jnp.float32) * (2.0 * math.pi / n_heads)
    grid_init = jnp.stack([jnp.cos(thetas), jnp.sin(thetas)], -1)
    grid_init = grid_init / jnp.max(jnp.abs(grid_init), axis=-1, keepdims=True)
    grid_init = jnp.tile(grid_init[:, None, None, :], (1, n_levels, n_points, 1))
    grid_init = grid_init * jnp.arange(1, n_points + 1,
                                       dtype=jnp.float32).reshape(1, 1, n_points, 1)
    so_w = jnp.zeros((d_model, n_heads * n_levels * n_points * 2), jnp.float32)
    so_b = grid_init.reshape(-1)
    aw_w = jnp.zeros((d_model, n_heads * n_levels * n_points), jnp.float32)
    aw_b = jnp.zeros((n_heads * n_levels * n_points,), jnp.float32)
    return dict(
        # sampling-offset + attention-weight projections fused (lane-dense out)
        soaw_w=jnp.concatenate([so_w, aw_w], axis=1),
        soaw_b=jnp.concatenate([so_b, aw_b]),
        vp_w=xavier_uniform(k1, (d_model, d_model)),
        vp_b=jnp.zeros((d_model,), jnp.float32),
        op_w=xavier_uniform(k2, (d_model, d_model)),
        op_b=jnp.zeros((d_model,), jnp.float32),
    )


def init_mha(key, d_model):
    ks = jax.random.split(key, 4)
    z = jnp.zeros((d_model,), jnp.float32)
    wq = xavier_uniform(ks[0], (d_model, d_model))
    wk = xavier_uniform(ks[1], (d_model, d_model))
    return dict(wqk=jnp.concatenate([wq, wk], axis=1),
                bqk=jnp.concatenate([z, z]),
                wv=xavier_uniform(ks[2], (d_model, d_model)), bv=z,
                wo=xavier_uniform(ks[3], (d_model, d_model)), bo=z)


def init_encoder_layer(key, d_model, d_ffn, n_levels, n_heads, n_points):
    ks = jax.random.split(key, 3)
    return dict(
        self_attn=init_msdeform_attn(ks[0], d_model, n_levels, n_heads, n_points),
        norm1=_ln(d_model),
        l1_w=xavier_uniform(ks[1], (d_model, d_ffn)),
        l1_b=jnp.zeros((d_ffn,), jnp.float32),
        l2_w=xavier_uniform(ks[2], (d_ffn, d_model)),
        l2_b=jnp.zeros((d_model,), jnp.float32),
        norm2=_ln(d_model),
    )


def init_decoder_layer(key, d_model, d_ffn, n_levels, n_heads, n_points):
    ks = jax.random.split(key, 4)
    return dict(
        cross_attn=init_msdeform_attn(ks[0], d_model, n_levels, n_heads, n_points),
        norm1=_ln(d_model),
        self_attn=init_mha(ks[1], d_model),
        norm2=_ln(d_model),
        l1_w=xavier_uniform(ks[2], (d_model, d_ffn)),
        l1_b=jnp.zeros((d_ffn,), jnp.float32),
        l2_w=xavier_uniform(ks[3], (d_ffn, d_model)),
        l2_b=jnp.zeros((d_model,), jnp.float32),
        norm3=_ln(d_model),
    )


def init_deformable_transformer(key, cfg):
    d = cfg['d_model']
    n_enc, n_dec = cfg['num_encoder_layers'], cfg['num_decoder_layers']
    ks = jax.random.split(key, n_enc + n_dec + 2)
    enc = [init_encoder_layer(ks[i], d, cfg['d_ffn'], cfg['n_levels'],
                              cfg['nhead'], cfg['n_points']) for i in range(n_enc)]
    dec = [init_decoder_layer(ks[n_enc + i], d, cfg['d_ffn'], cfg['n_levels'],
                              cfg['nhead'], cfg['n_points']) for i in range(n_dec)]
    return dict(
        encoder_layers=enc,
        decoder_layers=dec,
        level_embed=jax.random.normal(ks[-2], (cfg['n_levels'], d), jnp.float32),
        ref_w=xavier_uniform(ks[-1], (d, 2)),
        ref_b=jnp.zeros((2,), jnp.float32),
    )


# ----------------------------------- main ------------------------------------

if __name__ == "__main__":
    cfg = dict(d_model=32, nhead=4, num_encoder_layers=2, num_decoder_layers=2,
               d_ffn=64, n_levels=2, n_points=2, num_queries=8)
    spatial = [(8, 8), (4, 4)]
    bs = 2

    key = jax.random.PRNGKey(0)
    keys = jax.random.split(key, 2 * len(spatial) + 2)
    params = init_deformable_transformer(keys[0], cfg)

    srcs, masks, pos_embeds = [], [], []
    ki = 1
    for (H, W) in spatial:
        srcs.append(jax.random.normal(keys[ki], (bs, cfg['d_model'], H, W),
                                      jnp.float32)); ki += 1
        pos_embeds.append(jax.random.normal(keys[ki], (bs, cfg['d_model'], H, W),
                                            jnp.float32)); ki += 1
        m = jnp.zeros((bs, H, W), bool)
        m = m.at[1, :, W - 2:].set(True)   # pad last 2 columns of batch item 1
        masks.append(m)
    query_embed = jax.random.normal(keys[ki],
                                    (cfg['num_queries'], 2 * cfg['d_model']),
                                    jnp.float32)

    hs, init_ref, inter_ref, enc_cls, enc_coord = deformable_transformer_forward(
        params, srcs, masks, pos_embeds, query_embed, cfg)
    jax.block_until_ready((hs, init_ref, inter_ref))

    assert hs.shape == (bs, cfg['num_queries'], cfg['d_model'])
    assert init_ref.shape == (bs, cfg['num_queries'], 2)
    assert inter_ref.shape == (bs, cfg['num_queries'], 2)
    assert enc_cls is None and enc_coord is None
    assert bool(jnp.all(jnp.isfinite(hs)))
    print("KERNEL_OK")
</pallas_src>

<mosaic_0001>
module attributes {stable_mosaic.version = 11 : i64} {
  func.func @_masked_linear_kernel(%arg0: i32, %arg1: memref<160x32xf32, #tpu.memory_space<vmem>>, %arg2: memref<160x1xf32, #tpu.memory_space<vmem>>, %arg3: memref<32x32xbf16, #tpu.memory_space<vmem>>, %arg4: memref<1x32xf32, #tpu.memory_space<vmem>>, %arg5: memref<160x32xbf16, #tpu.memory_space<vmem>>) attributes {dimension_semantics = [#tpu.dimension_semantics<parallel>], iteration_bounds = array<i64: 1>, scalar_prefetch = 0 : i64, scratch_operands = 0 : i64, tpu.core_type = #tpu.core_type<tc>, window_params = [{transform_indices = @transform_0, window_bounds = array<i64: 160, 32>}, {transform_indices = @transform_1, window_bounds = array<i64: 160, 1>}, {pipeline_mode = #tpu.pipeline_mode<synchronous>, transform_indices = @transform_2, window_bounds = array<i64: 32, 32>}, {pipeline_mode = #tpu.pipeline_mode<synchronous>, transform_indices = @transform_3, window_bounds = array<i64: 1, 32>}, {transform_indices = @transform_4, window_bounds = array<i64: 160, 32>}]} {
    %c0 = arith.constant 0 : index
    %c0_0 = arith.constant 0 : index
    %0 = vector.load %arg1[%c0, %c0_0] : memref<160x32xf32, #tpu.memory_space<vmem>>, vector<160x32xf32>
    %1 = arith.truncf %0 : vector<160x32xf32> to vector<160x32xbf16>
    %c0_1 = arith.constant 0 : index
    %c0_2 = arith.constant 0 : index
    %2 = vector.load %arg3[%c0_1, %c0_2] : memref<32x32xbf16, #tpu.memory_space<vmem>>, vector<32x32xbf16>
    %cst = arith.constant dense<0.000000e+00> : vector<160x32xf32>
    %3 = tpu.matmul %1, %2, %cst {dimension_numbers = #tpu.dot_dimension_numbers<[1], [0], [0], [1], [0, 0, 1, 1], [], []>} : vector<160x32xbf16>, vector<32x32xbf16>, vector<160x32xf32> -> vector<160x32xf32>
    %c0_3 = arith.constant 0 : index
    %c0_4 = arith.constant 0 : index
    %4 = vector.load %arg4[%c0_3, %c0_4] : memref<1x32xf32, #tpu.memory_space<vmem>>, vector<1x32xf32>
    %5 = vector.broadcast %4 : vector<1x32xf32> to vector<160x32xf32>
    %6 = arith.addf %3, %5 : vector<160x32xf32>
    %c0_5 = arith.constant 0 : index
    %c0_6 = arith.constant 0 : index
    %7 = vector.load %arg2[%c0_5, %c0_6] : memref<160x1xf32, #tpu.memory_space<vmem>>, vector<160x1xf32>
    %8 = vector.broadcast %7 : vector<160x1xf32> to vector<160x32xf32>
    %9 = arith.mulf %6, %8 : vector<160x32xf32>
    %10 = arith.truncf %9 : vector<160x32xf32> to vector<160x32xbf16>
    %c0_7 = arith.constant 0 : index
    %c0_8 = arith.constant 0 : index
    %11 = vector.load %arg5[%c0_7, %c0_8] : memref<160x32xbf16, #tpu.memory_space<vmem>>, vector<160x32xbf16>
    tpu.vector_store %arg5[%c0_7, %c0_8], %10 {strides = array<i32>} : memref<160x32xbf16, #tpu.memory_space<vmem>>, vector<160x32xbf16>,
    return
  }
  func.func @transform_0(%arg0: i32) -> (i32, i32) {
    %c0_i32 = arith.constant 0 : i32
    %c0_i32_0 = arith.constant 0 : i32
    return %arg0, %c0_i32 : i32, i32
  }
  func.func @transform_1(%arg0: i32) -> (i32, i32) {
    %c0_i32 = arith.constant 0 : i32
    %c0_i32_0 = arith.constant 0 : i32
    return %arg0, %c0_i32 : i32, i32
  }
  func.func @transform_2(%arg0: i32) -> (i32, i32) {
    %c0_i32 = arith.constant 0 : i32
    %c0_i32_0 = arith.constant 0 : i32
    %c0_i32_1 = arith.constant 0 : i32
    return %c0_i32, %c0_i32_0 : i32, i32
  }
  func.func @transform_3(%arg0: i32) -> (i32, i32) {
    %c0_i32 = arith.constant 0 : i32
    %c0_i32_0 = arith.constant 0 : i32
    %c0_i32_1 = arith.constant 0 : i32
    return %c0_i32, %c0_i32_0 : i32, i32
  }
  func.func @transform_4(%arg0: i32) -> (i32, i32) {
    %c0_i32 = arith.constant 0 : i32
    %c0_i32_0 = arith.constant 0 : i32
    return %arg0, %c0_i32 : i32, i32
  }
}

</mosaic_0001>

<llo_original>
// kernel: tpu_custom_call.1
$region0: #{tpu_custom_call.1}
  #allocation0 [shape = 'u32[]', space=smem, size = 0x4, offset = 0x4, fixed_abs, tag = 'smem constant byte address 0x4 - core index']
  #allocation1 [shape = 'u32[72,128]{1,0:T(1,128)}', space=vmem, size = 0x9000, scoped, tag = 'internal scratch']
  %s0 = inlined_call_operand.vmem [shape: f32[160,32], index: 0, kind: input, shape index: {}]
  %s1 = inlined_call_operand.vmem [shape: f32[160,1], index: 1, kind: input, shape index: {}]
  %s2 = inlined_call_operand.vmem [shape: bf16[32,32], index: 2, kind: input, shape index: {}]
  %s3 = inlined_call_operand.vmem [shape: f32[1,32], index: 3, kind: input, shape index: {}]
  %s4 = inlined_call_operand.vmem [shape: bf16[160,32], index: 4, kind: output, shape index: {}]
  %s5 = sld [smem:[#allocation0]]
  $region26: #{tpu_custom_call.1} parent=0
    _
  %s7 = ssub.s32 1, %s5
  %s8 = scalar_select 0, %s7, %s5
  // Predicated region
  $region2: #{tpu_custom_call.1} parent=0 // pred_check
    _
  $region3: #{tpu_custom_call.1} parent=0 // pred_check_branch
    %10 = sbr.rel (0) target = $region5
  $region4: #{tpu_custom_call.1} parent=0 // pred_region
    _
  $region5: #{tpu_custom_call.1} parent=0 // pred_fallthru
    _
  // Predicated region
  $region6: #{tpu_custom_call.1} parent=0 // pred_check
    _
  $region7: #{tpu_custom_call.1} parent=0 // pred_check_branch
    %12 = sbr.rel (0) target = $region9
  $region8: #{tpu_custom_call.1} parent=0 // pred_region
    _
  $region9: #{tpu_custom_call.1} parent=0 // pred_fallthru
    _
  // Predicated region
  $region10: #{tpu_custom_call.1} parent=0 // pred_check
    _
  $region11: #{tpu_custom_call.1} parent=0 // pred_check_branch
    %14 = sbr.rel (0) target = $region13
  $region12: #{tpu_custom_call.1} parent=0 // pred_region
    _
  $region13: #{tpu_custom_call.1} parent=0 // pred_fallthru
    _
  // Predicated region
  $region14: #{tpu_custom_call.1} parent=0 // pred_check
    _
  $region15: #{tpu_custom_call.1} parent=0 // pred_check_branch
    %16 = sbr.rel (0) target = $region17
  $region16: #{tpu_custom_call.1} parent=0 // pred_region
    _
  $region17: #{tpu_custom_call.1} parent=0 // pred_fallthru
    _
  %v18 = vld [vmem:[%s0] sm:$0xff]
  %v19 = vld [vmem:[%s0 + $0x8] sm:$0xff]
  %v20 = vld [vmem:[%s0 + $0x10] sm:$0xff]
  %v21 = vld [vmem:[%s0 + $0x18] sm:$0xff]
  %v22 = vld [vmem:[%s0 + $0x20] sm:$0xff]
  %v23 = vld [vmem:[%s0 + $0x28] sm:$0xff]
  %v24 = vld [vmem:[%s0 + $0x30] sm:$0xff]
  %v25 = vld [vmem:[%s0 + $0x38] sm:$0xff]
  %v26 = vld [vmem:[%s0 + $0x40] sm:$0xff]
  %v27 = vld [vmem:[%s0 + $0x48] sm:$0xff]
  %v28 = vld [vmem:[%s0 + $0x50] sm:$0xff]
  %v29 = vld [vmem:[%s0 + $0x58] sm:$0xff]
  %v30 = vld [vmem:[%s0 + $0x60] sm:$0xff]
  %v31 = vld [vmem:[%s0 + $0x68] sm:$0xff]
  %v32 = vld [vmem:[%s0 + $0x70] sm:$0xff]
  %v33 = vld [vmem:[%s0 + $0x78] sm:$0xff]
  %v34 = vld [vmem:[%s0 + $0x80] sm:$0xff]
  %v35 = vld [vmem:[%s0 + $0x88] sm:$0xff]
  %v36 = vld [vmem:[%s0 + $0x90] sm:$0xff]
  %v37 = vld [vmem:[%s0 + $0x98] sm:$0xff]
  %v38 = vpack.c.bf16 %v19, %v18
  %v39 = vpack.c.bf16 %v21, %v20
  %v40 = vpack.c.bf16 %v23, %v22
  %v41 = vpack.c.bf16 %v25, %v24
  %v42 = vpack.c.bf16 %v27, %v26
  %v43 = vpack.c.bf16 %v29, %v28
  %v44 = vpack.c.bf16 %v31, %v30
  %v45 = vpack.c.bf16 %v33, %v32
  %v46 = vpack.c.bf16 %v35, %v34
  %v47 = vpack.c.bf16 %v37, %v36
  %v48 = vld [vmem:[%s2] sm:$0xf]
  %v49 = vld [vmem:[%s2 + $0x4] sm:$0xf]
  %v50 = vld [vmem:[%s2 + $0x8] sm:$0xf]
  %v51 = vld [vmem:[%s2 + $0xc] sm:$0xf]
  %v52 = vld [vmem:[%s3] sm:$0x1]
  %v54 = vperm.slane %v52, 0
  %v60 = vunpack.c.l.b16 %v48
  %v61 = vunpack.c.l.b16 %v49
  %v62 = vunpack.c.l.b16 %v50
  %v63 = vunpack.c.l.b16 %v51
  %v64 = vpack.c.b16 %v61, %v60
  %v65 = vpack.c.b16 %v63, %v62
  %vm68 = vcmask 261120
  %v70 = vsel %vm68, %v38, 0
  %v73 = vsel %vm68, %v39, 0
  %v76 = vsel %vm68, %v40, 0
  %v79 = vsel %vm68, %v41, 0
  %v82 = vsel %vm68, %v42, 0
  %v85 = vsel %vm68, %v43, 0
  %v88 = vsel %vm68, %v44, 0
  %v91 = vsel %vm68, %v45, 0
  %v94 = vsel %vm68, %v46, 0
  %v97 = vsel %vm68, %v47, 0
  %99 = vmatpush.bf16.msra.mxu0 0
  %100 = vmatpush.bf16.msra.mxu0 0
  %101 = vmatpush.bf16.msra.mxu0 0
  %102 = vmatpush.bf16.msra.mxu0 0
  %103 = vmatpush.bf16.msra.mxu0 0
  %104 = vmatpush.bf16.msra.mxu0 0
  %105 = vmatpush.bf16.msra.mxu0 %v65
  %106 = vmatpush.bf16.msra.mxu0 %v64
  %107 = vmatmul.bf16.gmra.mxu0 %v70
  %v108 = vpop.f32.mrf.mxu0
  %v109 = vadd.f32 %v54, %v108
  %v110 = vpop.f32.mrf.mxu0
  %v111 = vadd.f32 %v54, %v110
  %112 = vmatmul.bf16.gmra.mxu0 %v73
  %v113 = vpop.f32.mrf.mxu0
  %v114 = vadd.f32 %v54, %v113
  %v115 = vpop.f32.mrf.mxu0
  %v116 = vadd.f32 %v54, %v115
  %117 = vmatmul.bf16.gmra.mxu0 %v76
  %v118 = vpop.f32.mrf.mxu0
  %v119 = vadd.f32 %v54, %v118
  %v120 = vpop.f32.mrf.mxu0
  %v121 = vadd.f32 %v54, %v120
  %122 = vmatmul.bf16.gmra.mxu0 %v79
  %v123 = vpop.f32.mrf.mxu0
  %v124 = vadd.f32 %v54, %v123
  %v125 = vpop.f32.mrf.mxu0
  %v126 = vadd.f32 %v54, %v125
  %127 = vmatmul.bf16.gmra.mxu0 %v82
  %v128 = vpop.f32.mrf.mxu0
  %v129 = vadd.f32 %v54, %v128
  %v130 = vpop.f32.mrf.mxu0
  %v131 = vadd.f32 %v54, %v130
  %132 = vmatmul.bf16.gmra.mxu0 %v85
  %v133 = vpop.f32.mrf.mxu0
  %v134 = vadd.f32 %v54, %v133
  %v135 = vpop.f32.mrf.mxu0
  %v136 = vadd.f32 %v54, %v135
  %137 = vmatmul.bf16.gmra.mxu0 %v88
  %v138 = vpop.f32.mrf.mxu0
  %v139 = vadd.f32 %v54, %v138
  %v140 = vpop.f32.mrf.mxu0
  %v141 = vadd.f32 %v54, %v140
  %142 = vmatmul.bf16.gmra.mxu0 %v91
  %v143 = vpop.f32.mrf.mxu0
  %v144 = vadd.f32 %v54, %v143
  %v145 = vpop.f32.mrf.mxu0
  %v146 = vadd.f32 %v54, %v145
  %147 = vmatmul.bf16.gmra.mxu0 %v94
  %v148 = vpop.f32.mrf.mxu0
  %v149 = vadd.f32 %v54, %v148
  %v150 = vpop.f32.mrf.mxu0
  %v151 = vadd.f32 %v54, %v150
  %152 = vmatmul.bf16.gmra.mxu0 %v97
  %v153 = vpop.f32.mrf.mxu0
  %v154 = vadd.f32 %v54, %v153
  %v155 = vpop.f32.mrf.mxu0
  %v156 = vadd.f32 %v54, %v155
  %157 = vdwg.mxu0
  %v158 = vld [vmem:[%s1] sm:$0xff]
  %v159 = vld [vmem:[%s1 + $0x8] sm:$0xff]
  %v160 = vld [vmem:[%s1 + $0x10] sm:$0xff]
  %v161 = vld [vmem:[%s1 + $0x18] sm:$0xff]
  %v162 = vld [vmem:[%s1 + $0x20] sm:$0xff]
  %v163 = vld [vmem:[%s1 + $0x28] sm:$0xff]
  %v164 = vld [vmem:[%s1 + $0x30] sm:$0xff]
  %v165 = vld [vmem:[%s1 + $0x38] sm:$0xff]
  %v166 = vld [vmem:[%s1 + $0x40] sm:$0xff]
  %v167 = vld [vmem:[%s1 + $0x48] sm:$0xff]
  %v168 = vld [vmem:[%s1 + $0x50] sm:$0xff]
  %v169 = vld [vmem:[%s1 + $0x58] sm:$0xff]
  %v170 = vld [vmem:[%s1 + $0x60] sm:$0xff]
  %v171 = vld [vmem:[%s1 + $0x68] sm:$0xff]
  %v172 = vld [vmem:[%s1 + $0x70] sm:$0xff]
  %v173 = vld [vmem:[%s1 + $0x78] sm:$0xff]
  %v174 = vld [vmem:[%s1 + $0x80] sm:$0xff]
  %v175 = vld [vmem:[%s1 + $0x88] sm:$0xff]
  %v176 = vld [vmem:[%s1 + $0x90] sm:$0xff]
  %v177 = vld [vmem:[%s1 + $0x98] sm:$0xff]
  %179 = vset.pattern.permute.xlu0 0
  %180 = vperm.xlu0 %179, %v158
  %v181 = vpop.permute.xlu0 %180
  %184 = vset.pattern.permute.xlu0 0
  %185 = vperm.xlu0 %184, %v159
  %v186 = vpop.permute.xlu0 %185
  %189 = vset.pattern.permute.xlu0 0
  %190 = vperm.xlu0 %189, %v160
  %v191 = vpop.permute.xlu0 %190
  %194 = vset.pattern.permute.xlu0 0
  %195 = vperm.xlu0 %194, %v161
  %v196 = vpop.permute.xlu0 %195
  %199 = vset.pattern.permute.xlu0 0
  %200 = vperm.xlu0 %199, %v162
  %v201 = vpop.permute.xlu0 %200
  %204 = vset.pattern.permute.xlu0 0
  %205 = vperm.xlu0 %204, %v163
  %v206 = vpop.permute.xlu0 %205
  %209 = vset.pattern.permute.xlu0 0
  %210 = vperm.xlu0 %209, %v164
  %v211 = vpop.permute.xlu0 %210
  %214 = vset.pattern.permute.xlu0 0
  %215 = vperm.xlu0 %214, %v165
  %v216 = vpop.permute.xlu0 %215
  %219 = vset.pattern.permute.xlu0 0
  %220 = vperm.xlu0 %219, %v166
  %v221 = vpop.permute.xlu0 %220
  %224 = vset.pattern.permute.xlu0 0
  %225 = vperm.xlu0 %224, %v167
  %v226 = vpop.permute.xlu0 %225
  %229 = vset.pattern.permute.xlu0 0
  %230 = vperm.xlu0 %229, %v168
  %v231 = vpop.permute.xlu0 %230
  %234 = vset.pattern.permute.xlu0 0
  %235 = vperm.xlu0 %234, %v169
  %v236 = vpop.permute.xlu0 %235
  %239 = vset.pattern.permute.xlu0 0
  %240 = vperm.xlu0 %239, %v170
  %v241 = vpop.permute.xlu0 %240
  %244 = vset.pattern.permute.xlu0 0
  %245 = vperm.xlu0 %244, %v171
  %v246 = vpop.permute.xlu0 %245
  %249 = vset.pattern.permute.xlu0 0
  %250 = vperm.xlu0 %249, %v172
  %v251 = vpop.permute.xlu0 %250
  %254 = vset.pattern.permute.xlu0 0
  %255 = vperm.xlu0 %254, %v173
  %v256 = vpop.permute.xlu0 %255
  %259 = vset.pattern.permute.xlu0 0
  %260 = vperm.xlu0 %259, %v174
  %v261 = vpop.permute.xlu0 %260
  %264 = vset.pattern.permute.xlu0 0
  %265 = vperm.xlu0 %264, %v175
  %v266 = vpop.permute.xlu0 %265
  %269 = vset.pattern.permute.xlu0 0
  %270 = vperm.xlu0 %269, %v176
  %v271 = vpop.permute.xlu0 %270
  %274 = vset.pattern.permute.xlu0 0
  %275 = vperm.xlu0 %274, %v177
  %v276 = vpop.permute.xlu0 %275
  %v278 = vmul.f32 %v109, %v181
  %v279 = vmul.f32 %v111, %v186
  %v280 = vmul.f32 %v114, %v191
  %v281 = vmul.f32 %v116, %v196
  %v282 = vmul.f32 %v119, %v201
  %v283 = vmul.f32 %v121, %v206
  %v284 = vmul.f32 %v124, %v211
  %v285 = vmul.f32 %v126, %v216
  %v286 = vmul.f32 %v129, %v221
  %v287 = vmul.f32 %v131, %v226
  %v288 = vmul.f32 %v134, %v231
  %v289 = vmul.f32 %v136, %v236
  %v290 = vmul.f32 %v139, %v241
  %v291 = vmul.f32 %v141, %v246
  %v292 = vmul.f32 %v144, %v251
  %v293 = vmul.f32 %v146, %v256
  %v294 = vmul.f32 %v149, %v261
  %v295 = vmul.f32 %v151, %v266
  %v296 = vmul.f32 %v154, %v271
  %v297 = vmul.f32 %v156, %v276
  %v298 = vpack.c.bf16 %v278, %v278
  %v299 = vpack.c.bf16 %v279, %v279
  %v300 = vpack.c.bf16 %v280, %v280
  %v301 = vpack.c.bf16 %v281, %v281
  %v302 = vpack.c.bf16 %v282, %v282
  %v303 = vpack.c.bf16 %v283, %v283
  %v304 = vpack.c.bf16 %v284, %v284
  %v305 = vpack.c.bf16 %v285, %v285
  %v306 = vpack.c.bf16 %v286, %v286
  %v307 = vpack.c.bf16 %v287, %v287
  %v308 = vpack.c.bf16 %v288, %v288
  %v309 = vpack.c.bf16 %v289, %v289
  %v310 = vpack.c.bf16 %v290, %v290
  %v311 = vpack.c.bf16 %v291, %v291
  %v312 = vpack.c.bf16 %v292, %v292
  %v313 = vpack.c.bf16 %v293, %v293
  %v314 = vpack.c.bf16 %v294, %v294
  %v315 = vpack.c.bf16 %v295, %v295
  %v316 = vpack.c.bf16 %v296, %v296
  %v317 = vpack.c.bf16 %v297, %v297
  %vm318 = vcmask 257024
  %319 = vst.msk [vmem:[%s4] sm:$0xf] %vm318, %v298
  %320 = vst.msk [vmem:[%s4 + $0x4] sm:$0xf] %vm318, %v299
  %321 = vst.msk [vmem:[%s4 + $0x8] sm:$0xf] %vm318, %v300
  %322 = vst.msk [vmem:[%s4 + $0xc] sm:$0xf] %vm318, %v301
  %323 = vst.msk [vmem:[%s4 + $0x10] sm:$0xf] %vm318, %v302
  %324 = vst.msk [vmem:[%s4 + $0x14] sm:$0xf] %vm318, %v303
  %325 = vst.msk [vmem:[%s4 + $0x18] sm:$0xf] %vm318, %v304
  %326 = vst.msk [vmem:[%s4 + $0x1c] sm:$0xf] %vm318, %v305
  %327 = vst.msk [vmem:[%s4 + $0x20] sm:$0xf] %vm318, %v306
  %328 = vst.msk [vmem:[%s4 + $0x24] sm:$0xf] %vm318, %v307
  %329 = vst.msk [vmem:[%s4 + $0x28] sm:$0xf] %vm318, %v308
  %330 = vst.msk [vmem:[%s4 + $0x2c] sm:$0xf] %vm318, %v309
  %331 = vst.msk [vmem:[%s4 + $0x30] sm:$0xf] %vm318, %v310
  %332 = vst.msk [vmem:[%s4 + $0x34] sm:$0xf] %vm318, %v311
  %333 = vst.msk [vmem:[%s4 + $0x38] sm:$0xf] %vm318, %v312
  %334 = vst.msk [vmem:[%s4 + $0x3c] sm:$0xf] %vm318, %v313
  %335 = vst.msk [vmem:[%s4 + $0x40] sm:$0xf] %vm318, %v314
  %336 = vst.msk [vmem:[%s4 + $0x44] sm:$0xf] %vm318, %v315
  %337 = vst.msk [vmem:[%s4 + $0x48] sm:$0xf] %vm318, %v316
  %338 = vst.msk [vmem:[%s4 + $0x4c] sm:$0xf] %vm318, %v317
  // Predicated region
  $region18: #{tpu_custom_call.1} parent=0 // pred_check
    _
  $region19: #{tpu_custom_call.1} parent=0 // pred_check_branch
    %340 = sbr.rel (0) target = $region21
  $region20: #{tpu_custom_call.1} parent=0 // pred_region
    _
  $region21: #{tpu_custom_call.1} parent=0 // pred_fallthru
    _
  // Predicated region
  $region22: #{tpu_custom_call.1} parent=0 // pred_check
    _
  $region23: #{tpu_custom_call.1} parent=0 // pred_check_branch
    %342 = sbr.rel (0) target = $region25
  $region24: #{tpu_custom_call.1} parent=0 // pred_region
    _
  $region25: #{tpu_custom_call.1} parent=0 // pred_fallthru
    _

</llo_original>
